<compile_context>
chip_gen: v7x
topology: tpu7x:2x2x1
jax: 0.10.0
libtpu: 0.0.40
codegen_flags: <defaults>
</compile_context>

<pallas_src>
import functools

import jax
import jax.numpy as jnp
from jax import lax
from jax.experimental import pallas as pl
from jax.experimental.pallas import tpu as pltpu


def _round_up(x, m):
    return (x + m - 1) // m * m


def _trojan_loss_kernel(alpha, beta, m_total, tm, need_mask,
                        pred_ref, tgt_ref, trig_ref, bounds_ref, w_ref, updw_ref,
                        out_ref, acc_ref):
    i = pl.program_id(0)
    last = pl.num_programs(0) - 1

    @pl.when(i == 0)
    def _init():
        acc_ref[...] = jnp.zeros_like(acc_ref)

    # ---- loss_constraint partial sum over this M tile ------------------------
    # max((u/||u||) @ w) == max(u @ w) / ||u|| because the per-row scale is > 0,
    # so the per-element normalization (and its [TM,128] temp) is dropped.
    upd = updw_ref[...]                                        # native dtype tile
    upd_f32 = upd.astype(jnp.float32)
    # Row squared norm on the MXU: (u*u) @ ones[128,1] -> [TM,1].  Offloads the
    # 128-lane reduction from the XLU; the MXU slot has slack (K is small).
    ones_col = jnp.ones((upd.shape[1], 1), jnp.float32)
    sq = jnp.dot(upd_f32 * upd_f32, ones_col,
                 preferred_element_type=jnp.float32)           # [TM, 1]
    scores = jnp.dot(upd, w_ref[...],
                     preferred_element_type=jnp.float32)       # [TM, K] on the MXU
    rowmax = jnp.max(scores, axis=-1, keepdims=True)           # [TM, 1]
    # rowmax / max(sqrt(sq), 1e-12) == rowmax * rsqrt(max(sq, 1e-24)); rsqrt goes
    # to the EUP (separate bundle slot) instead of VPU sqrt + divide.
    inv_norm = lax.rsqrt(jnp.maximum(sq, 1e-24))
    vals = jnp.abs(1.0 - rowmax * inv_norm)                    # [TM, 1]

    if need_mask:
        # Padded tail rows exist only in the last tile; mask them out there and
        # skip the iota/compare/select work on every other tile.
        @pl.when(i < last)
        def _full_tile():
            acc_ref[...] += jnp.sum(vals, keepdims=True)

        @pl.when(i == last)
        def _tail_tile():
            row_ids = i * tm + lax.broadcasted_iota(jnp.int32, vals.shape, 0)
            acc_ref[...] += jnp.sum(jnp.where(row_ids < m_total, vals, 0.0),
                                    keepdims=True)
    else:
        acc_ref[...] += jnp.sum(vals, keepdims=True)           # (1,1) running sum

    # ---- finalize: cross-entropy + trigger loss + weighted sum (once) --------
    @pl.when(i == last)
    def _finalize():
        pred = pred_ref[...].astype(jnp.float32)               # [N, n_cls]
        row_max = jnp.max(pred, axis=-1, keepdims=True)
        lse = row_max + jnp.log(
            jnp.sum(jnp.exp(pred - row_max), axis=-1, keepdims=True))   # [N, 1]
        cls_ids = lax.broadcasted_iota(jnp.int32, pred.shape, 1)
        tgt_logit = jnp.sum(jnp.where(cls_ids == tgt_ref[...], pred, 0.0),
                            axis=-1, keepdims=True)            # [N, 1]
        loss_ce = jnp.mean(lse - tgt_logit)

        trig = trig_ref[...].astype(jnp.float32)               # [C, H*W]
        max_v = jnp.max(trig, axis=-1, keepdims=True)          # [C, 1]
        min_v = jnp.min(trig, axis=-1, keepdims=True)          # [C, 1]
        bounds = bounds_ref[...].astype(jnp.float32)           # [C, 2]
        loss_trigger = (jnp.mean((max_v - bounds[:, 0:1]) ** 2)
                        + jnp.mean((min_v - bounds[:, 1:2]) ** 2))

        loss_blocks = acc_ref[0, 0] * (1.0 / m_total)
        out_ref[0, 0] = loss_ce + alpha * loss_blocks + beta * loss_trigger


def trojan_attack_loss(pred, target, updated_weights, w, trigger,
                       mean, std, alpha=1.0, beta=1.0, tm=4096):
    """pred: [N, n_cls], target: [N] int, updated_weights: [M, 128],
    w: [128, K], trigger: [1, C, H, W] (NCHW). Inputs keep their native dtype
    (f32 or bf16); all post-MXU arithmetic is f32 inside the kernel."""
    n, n_cls = pred.shape
    c = trigger.shape[1]
    m_total, d = updated_weights.shape
    k = w.shape[1]

    trig2d = trigger.reshape(c, -1)                         # trigger.view(C, -1), N == 1
    maxn = ((1.0 - mean) / std).astype(jnp.float32)
    minn = ((0.0 - mean) / std).astype(jnp.float32)
    bounds = jnp.stack([maxn, minn], axis=1)                # [C, 2]
    tgt2d = target.astype(jnp.int32).reshape(n, 1)          # [N, 1] int32

    # Tile M: tiles are multiples of 8 sublanes; tail rows are zero-padded and
    # masked out of the accumulator inside the kernel (last tile only).  4096
    # f32 rows ~= 2 MiB per buffer -> double-buffered 4 MiB, comfortably inside
    # VMEM on v5e/v6e (128 MiB) and v7x (64 MiB).
    tm_eff = _round_up(min(int(tm), _round_up(m_total, 8)), 8)
    m_pad = _round_up(m_total, tm_eff)
    need_mask = m_pad != m_total
    if need_mask:
        updated_weights = jnp.pad(updated_weights, ((0, m_pad - m_total), (0, 0)))
    grid_m = m_pad // tm_eff

    kernel = functools.partial(_trojan_loss_kernel, float(alpha), float(beta),
                               int(m_total), int(tm_eff), bool(need_mask))

    def resident(shape):
        return pl.BlockSpec(shape, lambda i: (0, 0))

    out = pl.pallas_call(
        kernel,
        out_shape=jax.ShapeDtypeStruct((1, 1), jnp.float32),
        grid_spec=pltpu.PrefetchScalarGridSpec(
            num_scalar_prefetch=0,
            grid=(grid_m,),
            in_specs=[
                resident((n, n_cls)),                         # pred
                resident((n, 1)),                             # target indices
                resident((c, trig2d.shape[1])),               # trigger [C, H*W]
                resident((c, 2)),                             # [maxn | minn]
                resident((d, k)),                             # w (resident)
                pl.BlockSpec((tm_eff, d), lambda i: (i, 0)),  # updated_weights tile
            ],
            out_specs=pl.BlockSpec((1, 1), lambda i: (0, 0),
                                   memory_space=pltpu.MemorySpace.SMEM),
            scratch_shapes=[pltpu.VMEM((1, 1), jnp.float32)],
        ),
        compiler_params=pltpu.CompilerParams(
            dimension_semantics=("arbitrary",)),
    )(pred, tgt2d, trig2d, bounds, w, updated_weights)
    return out[0, 0]


def _reference(pred, target, updated_weights, w, trigger, mean, std, alpha, beta):
    # pure-JAX reference mirroring the PyTorch module
    logp = jax.nn.log_softmax(pred.astype(jnp.float32), axis=-1)
    loss_ce = -jnp.mean(jnp.take_along_axis(logp, target[:, None], axis=1))
    uw = updated_weights.astype(jnp.float32)
    norm = jnp.sqrt(jnp.sum(uw ** 2, axis=1, keepdims=True))
    un = uw / jnp.maximum(norm, 1e-12)
    scores = un @ w.astype(jnp.float32)
    loss_blocks = jnp.mean(jnp.abs(1.0 - jnp.max(scores, axis=1)))
    c = trigger.shape[1]
    t2 = trigger.reshape(c, -1).astype(jnp.float32)
    maxn = (1.0 - mean) / std
    minn = (0.0 - mean) / std
    loss_trig = jnp.mean((t2.max(1) - maxn) ** 2) + jnp.mean((t2.min(1) - minn) ** 2)
    return loss_ce + alpha * loss_blocks + beta * loss_trig


if __name__ == "__main__":
    key = jax.random.PRNGKey(0)
    k_pred, k_tgt, k_w, k_uw, k_trig, k_uw2 = jax.random.split(key, 6)

    N, NUM_CLASSES = 8, 10
    M, D, K = 32, 128, 16          # synthetic masked-conv weight rows of width 128
    C, H, W = 4, 16, 16

    pred = jax.random.normal(k_pred, (N, NUM_CLASSES), jnp.float32)
    target = jax.random.randint(k_tgt, (N,), 0, NUM_CLASSES, jnp.int32)
    updated_weights = jax.random.normal(k_uw, (M, D), jnp.float32) * 0.1
    w_proj = jax.random.normal(k_w, (D, K), jnp.float32) * 0.1
    trigger = jax.random.normal(k_trig, (1, C, H, W), jnp.float32) * 0.5

    mean = jnp.array([0.485, 0.456, 0.406, 0.5], jnp.float32)
    std = jnp.array([0.229, 0.224, 0.225, 0.25], jnp.float32)
    alpha, beta = 1.0, 1.0

    # single-tile case (no padding -> mask code not even emitted)
    loss = trojan_attack_loss(pred, target, updated_weights, w_proj, trigger,
                              mean, std, alpha, beta)
    loss = jax.block_until_ready(loss)
    ref = _reference(pred, target, updated_weights, w_proj, trigger,
                     mean, std, alpha, beta)
    assert jnp.allclose(loss, ref, rtol=1e-4, atol=1e-4), (loss, ref)

    # multi-tile case with ragged M (exercises grid accumulation + tail masking)
    M2 = 1000
    updated_weights2 = jax.random.normal(k_uw2, (M2, D), jnp.float32) * 0.1
    loss2 = trojan_attack_loss(pred, target, updated_weights2, w_proj, trigger,
                               mean, std, alpha, beta, tm=256)
    loss2 = jax.block_until_ready(loss2)
    ref2 = _reference(pred, target, updated_weights2, w_proj, trigger,
                      mean, std, alpha, beta)
    assert jnp.allclose(loss2, ref2, rtol=1e-4, atol=1e-4), (loss2, ref2)

    print("KERNEL_OK")
</pallas_src>

<mosaic_0001>
module attributes {stable_mosaic.version = 11 : i64} {
  func.func @_trojan_loss_kernel(%arg0: i32, %arg1: memref<8x10xf32, #tpu.memory_space<vmem>>, %arg2: memref<8x1xi32, #tpu.memory_space<vmem>>, %arg3: memref<4x256xf32, #tpu.memory_space<vmem>>, %arg4: memref<4x2xf32, #tpu.memory_space<vmem>>, %arg5: memref<128x16xf32, #tpu.memory_space<vmem>>, %arg6: memref<32x128xf32, #tpu.memory_space<vmem>>, %arg7: memref<1x1xf32, #tpu.memory_space<smem>>, %arg8: memref<1x1xf32, #tpu.memory_space<vmem>>) attributes {dimension_semantics = [#tpu.dimension_semantics<arbitrary>], iteration_bounds = array<i64: 1>, scalar_prefetch = 0 : i64, scratch_operands = 1 : i64, tpu.core_type = #tpu.core_type<tc>, window_params = [{pipeline_mode = #tpu.pipeline_mode<synchronous>, transform_indices = @transform_0, window_bounds = array<i64: 8, 10>}, {pipeline_mode = #tpu.pipeline_mode<synchronous>, transform_indices = @transform_1, window_bounds = array<i64: 8, 1>}, {pipeline_mode = #tpu.pipeline_mode<synchronous>, transform_indices = @transform_2, window_bounds = array<i64: 4, 256>}, {pipeline_mode = #tpu.pipeline_mode<synchronous>, transform_indices = @transform_3, window_bounds = array<i64: 4, 2>}, {pipeline_mode = #tpu.pipeline_mode<synchronous>, transform_indices = @transform_4, window_bounds = array<i64: 128, 16>}, {transform_indices = @transform_5, window_bounds = array<i64: 32, 128>}, {transform_indices = @transform_6, window_bounds = array<i64: 1, 1>}]} {
    %c0_i32 = arith.constant 0 : i32
    %0 = arith.cmpi eq, %arg0, %c0_i32 : i32
    %1 = arith.extui %0 : i1 to i32
    %c0_i32_0 = arith.constant 0 : i32
    %2 = arith.cmpi ne, %1, %c0_i32_0 : i32
    scf.if %2 {
      %cst_16 = arith.constant 0.000000e+00 : f32
      %29 = vector.broadcast %cst_16 : f32 to vector<1x1xf32>
      %c0_17 = arith.constant 0 : index
      %c0_18 = arith.constant 0 : index
      %30 = vector.load %arg8[%c0_17, %c0_18] : memref<1x1xf32, #tpu.memory_space<vmem>>, vector<1x1xf32>
      tpu.vector_store %arg8[%c0_17, %c0_18], %29 {strides = array<i32>} : memref<1x1xf32, #tpu.memory_space<vmem>>, vector<1x1xf32>,
    } else {
    }
    %c0 = arith.constant 0 : index
    %c0_1 = arith.constant 0 : index
    %3 = vector.load %arg6[%c0, %c0_1] : memref<32x128xf32, #tpu.memory_space<vmem>>, vector<32x128xf32>
    %cst = arith.constant 1.000000e+00 : f32
    %4 = vector.broadcast %cst : f32 to vector<128x1xf32>
    %5 = arith.mulf %3, %3 : vector<32x128xf32>
    %cst_2 = arith.constant dense<0.000000e+00> : vector<32x1xf32>
    %6 = tpu.matmul %5, %4, %cst_2 {dimension_numbers = #tpu.dot_dimension_numbers<[1], [0], [0], [1], [0, 0, 1, 1], [], []>} : vector<32x128xf32>, vector<128x1xf32>, vector<32x1xf32> -> vector<32x1xf32>
    %c0_3 = arith.constant 0 : index
    %c0_4 = arith.constant 0 : index
    %7 = vector.load %arg5[%c0_3, %c0_4] : memref<128x16xf32, #tpu.memory_space<vmem>>, vector<128x16xf32>
    %cst_5 = arith.constant dense<0.000000e+00> : vector<32x16xf32>
    %8 = tpu.matmul %3, %7, %cst_5 {dimension_numbers = #tpu.dot_dimension_numbers<[1], [0], [0], [1], [0, 0, 1, 1], [], []>} : vector<32x128xf32>, vector<128x16xf32>, vector<32x16xf32> -> vector<32x16xf32>
    %cst_6 = arith.constant dense<0xFF800000> : vector<32xf32>
    %9 = vector.multi_reduction <maximumf>, %8, %cst_6 [1] : vector<32x16xf32> to vector<32xf32>
    %10 = vector.shape_cast %9 : vector<32xf32> to vector<32x1xf32>
    %cst_7 = arith.constant 1.000000e-24 : f32
    %11 = vector.broadcast %cst_7 : f32 to vector<32x1xf32>
    %12 = arith.maximumf %6, %11 : vector<32x1xf32>
    %13 = math.rsqrt %12 : vector<32x1xf32>
    %14 = arith.mulf %10, %13 : vector<32x1xf32>
    %cst_8 = arith.constant 1.000000e+00 : f32
    %15 = vector.broadcast %cst_8 : f32 to vector<32x1xf32>
    %16 = arith.subf %15, %14 : vector<32x1xf32>
    %17 = math.absf %16 : vector<32x1xf32>
    %c0_9 = arith.constant 0 : index
    %c0_10 = arith.constant 0 : index
    %18 = vector.load %arg8[%c0_9, %c0_10] : memref<1x1xf32, #tpu.memory_space<vmem>>, vector<1x1xf32>
    %19 = vector.shape_cast %17 : vector<32x1xf32> to vector<1x32x1xf32>
    %cst_11 = arith.constant dense<0.000000e+00> : vector<1xf32>
    %20 = vector.multi_reduction <add>, %19, %cst_11 [1, 2] : vector<1x32x1xf32> to vector<1xf32>
    %21 = vector.shape_cast %20 : vector<1xf32> to vector<1x1x1xf32>
    %22 = vector.extract %21[0, 0, 0] : f32 from vector<1x1x1xf32>
    %23 = vector.broadcast %22 : f32 to vector<1x1xf32>
    %24 = arith.addf %18, %23 : vector<1x1xf32>
    %c0_12 = arith.constant 0 : index
    %c0_13 = arith.constant 0 : index
    %25 = vector.load %arg8[%c0_12, %c0_13] : memref<1x1xf32, #tpu.memory_space<vmem>>, vector<1x1xf32>
    tpu.vector_store %arg8[%c0_12, %c0_13], %24 {strides = array<i32>} : memref<1x1xf32, #tpu.memory_space<vmem>>, vector<1x1xf32>,
    %c0_i32_14 = arith.constant 0 : i32
    %26 = arith.cmpi eq, %arg0, %c0_i32_14 : i32
    %27 = arith.extui %26 : i1 to i32
    %c0_i32_15 = arith.constant 0 : i32
    %28 = arith.cmpi ne, %27, %c0_i32_15 : i32
    scf.if %28 {
      %c0_16 = arith.constant 0 : index
      %c0_17 = arith.constant 0 : index
      %29 = vector.load %arg1[%c0_16, %c0_17] : memref<8x10xf32, #tpu.memory_space<vmem>>, vector<8x10xf32>
      %cst_18 = arith.constant dense<0xFF800000> : vector<8xf32>
      %30 = vector.multi_reduction <maximumf>, %29, %cst_18 [1] : vector<8x10xf32> to vector<8xf32>
      %31 = vector.shape_cast %30 : vector<8xf32> to vector<8x1xf32>
      %32 = vector.broadcast %31 : vector<8x1xf32> to vector<8x10xf32>
      %33 = arith.subf %29, %32 : vector<8x10xf32>
      %34 = math.exp %33 : vector<8x10xf32>
      %cst_19 = arith.constant dense<0.000000e+00> : vector<8xf32>
      %35 = vector.multi_reduction <add>, %34, %cst_19 [1] : vector<8x10xf32> to vector<8xf32>
      %36 = vector.shape_cast %35 : vector<8xf32> to vector<8x1xf32>
      %37 = math.log %36 : vector<8x1xf32>
      %38 = arith.addf %31, %37 : vector<8x1xf32>
      %39 = tpu.iota {dimensions = array<i32: 1>} : vector<8x10xi32>
      %c0_20 = arith.constant 0 : index
      %c0_21 = arith.constant 0 : index
      %40 = vector.load %arg2[%c0_20, %c0_21] : memref<8x1xi32, #tpu.memory_space<vmem>>, vector<8x1xi32>
      %41 = vector.broadcast %40 : vector<8x1xi32> to vector<8x10xi32>
      %42 = arith.cmpi eq, %39, %41 : vector<8x10xi32>
      %cst_22 = arith.constant 0.000000e+00 : f32
      %43 = vector.broadcast %cst_22 : f32 to vector<8x10xf32>
      %44 = arith.select %42, %29, %43 : vector<8x10xi1>, vector<8x10xf32>
      %cst_23 = arith.constant dense<0.000000e+00> : vector<8xf32>
      %45 = vector.multi_reduction <add>, %44, %cst_23 [1] : vector<8x10xf32> to vector<8xf32>
      %46 = vector.shape_cast %45 : vector<8xf32> to vector<8x1xf32>
      %47 = arith.subf %38, %46 : vector<8x1xf32>
      %48 = vector.shape_cast %47 : vector<8x1xf32> to vector<1x8x1xf32>
      %cst_24 = arith.constant dense<0.000000e+00> : vector<1xf32>
      %49 = vector.multi_reduction <add>, %48, %cst_24 [1, 2] : vector<1x8x1xf32> to vector<1xf32>
      %50 = vector.shape_cast %49 : vector<1xf32> to vector<1x1x1xf32>
      %51 = vector.extract %50[0, 0, 0] : f32 from vector<1x1x1xf32>
      %cst_25 = arith.constant 8.000000e+00 : f32
      %52 = arith.divf %51, %cst_25 : f32
      %c0_26 = arith.constant 0 : index
      %c0_27 = arith.constant 0 : index
      %53 = vector.load %arg3[%c0_26, %c0_27] : memref<4x256xf32, #tpu.memory_space<vmem>>, vector<4x256xf32>
      %cst_28 = arith.constant dense<0xFF800000> : vector<4xf32>
      %54 = vector.multi_reduction <maximumf>, %53, %cst_28 [1] : vector<4x256xf32> to vector<4xf32>
      %55 = vector.shape_cast %54 : vector<4xf32> to vector<4x1xf32>
      %cst_29 = arith.constant dense<0x7F800000> : vector<4xf32>
      %56 = vector.multi_reduction <minimumf>, %53, %cst_29 [1] : vector<4x256xf32> to vector<4xf32>
      %57 = vector.shape_cast %56 : vector<4xf32> to vector<4x1xf32>
      %c0_30 = arith.constant 0 : index
      %c0_31 = arith.constant 0 : index
      %58 = vector.load %arg4[%c0_30, %c0_31] : memref<4x2xf32, #tpu.memory_space<vmem>>, vector<4x2xf32>
      %59 = vector.extract_strided_slice %58 {offsets = [0, 0], sizes = [4, 1], strides = [1, 1]} : vector<4x2xf32> to vector<4x1xf32>
      %60 = arith.subf %55, %59 : vector<4x1xf32>
      %61 = arith.mulf %60, %60 : vector<4x1xf32>
      %62 = vector.shape_cast %61 : vector<4x1xf32> to vector<1x4x1xf32>
      %cst_32 = arith.constant dense<0.000000e+00> : vector<1xf32>
      %63 = vector.multi_reduction <add>, %62, %cst_32 [1, 2] : vector<1x4x1xf32> to vector<1xf32>
      %64 = vector.shape_cast %63 : vector<1xf32> to vector<1x1x1xf32>
      %65 = vector.extract %64[0, 0, 0] : f32 from vector<1x1x1xf32>
      %cst_33 = arith.constant 4.000000e+00 : f32
      %66 = arith.divf %65, %cst_33 : f32
      %67 = vector.extract_strided_slice %58 {offsets = [0, 1], sizes = [4, 1], strides = [1, 1]} : vector<4x2xf32> to vector<4x1xf32>
      %68 = arith.subf %57, %67 : vector<4x1xf32>
      %69 = arith.mulf %68, %68 : vector<4x1xf32>
      %70 = vector.shape_cast %69 : vector<4x1xf32> to vector<1x4x1xf32>
      %cst_34 = arith.constant dense<0.000000e+00> : vector<1xf32>
      %71 = vector.multi_reduction <add>, %70, %cst_34 [1, 2] : vector<1x4x1xf32> to vector<1xf32>
      %72 = vector.shape_cast %71 : vector<1xf32> to vector<1x1x1xf32>
      %73 = vector.extract %72[0, 0, 0] : f32 from vector<1x1x1xf32>
      %cst_35 = arith.constant 4.000000e+00 : f32
      %74 = arith.divf %73, %cst_35 : f32
      %75 = arith.addf %66, %74 : f32
      %c0_36 = arith.constant 0 : index
      %c0_37 = arith.constant 0 : index
      %76 = vector.load %arg8[%c0_36, %c0_37] : memref<1x1xf32, #tpu.memory_space<vmem>>, vector<1x1xf32>
      %77 = vector.extract %76[0, 0] : f32 from vector<1x1xf32>
      %cst_38 = arith.constant 3.125000e-02 : f32
      %78 = arith.mulf %77, %cst_38 : f32
      %cst_39 = arith.constant 1.000000e+00 : f32
      %79 = arith.mulf %cst_39, %78 : f32
      %80 = arith.addf %52, %79 : f32
      %cst_40 = arith.constant 1.000000e+00 : f32
      %81 = arith.mulf %cst_40, %75 : f32
      %82 = arith.addf %80, %81 : f32
      %c0_41 = arith.constant 0 : index
      %c0_42 = arith.constant 0 : index
      %83 = memref.load %arg7[%c0_41, %c0_42] : memref<1x1xf32, #tpu.memory_space<smem>>
      memref.store %82, %arg7[%c0_41, %c0_42] : memref<1x1xf32, #tpu.memory_space<smem>>
    } else {
    }
    return
  }
  func.func @transform_0(%arg0: i32) -> (i32, i32) {
    %c0_i32 = arith.constant 0 : i32
    %c0_i32_0 = arith.constant 0 : i32
    %c0_i32_1 = arith.constant 0 : i32
    return %c0_i32, %c0_i32_0 : i32, i32
  }
  func.func @transform_1(%arg0: i32) -> (i32, i32) {
    %c0_i32 = arith.constant 0 : i32
    %c0_i32_0 = arith.constant 0 : i32
    %c0_i32_1 = arith.constant 0 : i32
    return %c0_i32, %c0_i32_0 : i32, i32
  }
  func.func @transform_2(%arg0: i32) -> (i32, i32) {
    %c0_i32 = arith.constant 0 : i32
    %c0_i32_0 = arith.constant 0 : i32
    %c0_i32_1 = arith.constant 0 : i32
    return %c0_i32, %c0_i32_0 : i32, i32
  }
  func.func @transform_3(%arg0: i32) -> (i32, i32) {
    %c0_i32 = arith.constant 0 : i32
    %c0_i32_0 = arith.constant 0 : i32
    %c0_i32_1 = arith.constant 0 : i32
    return %c0_i32, %c0_i32_0 : i32, i32
  }
  func.func @transform_4(%arg0: i32) -> (i32, i32) {
    %c0_i32 = arith.constant 0 : i32
    %c0_i32_0 = arith.constant 0 : i32
    %c0_i32_1 = arith.constant 0 : i32
    return %c0_i32, %c0_i32_0 : i32, i32
  }
  func.func @transform_5(%arg0: i32) -> (i32, i32) {
    %c0_i32 = arith.constant 0 : i32
    %c0_i32_0 = arith.constant 0 : i32
    return %arg0, %c0_i32 : i32, i32
  }
  func.func @transform_6(%arg0: i32) -> (i32, i32) {
    %c0_i32 = arith.constant 0 : i32
    %c0_i32_0 = arith.constant 0 : i32
    %c0_i32_1 = arith.constant 0 : i32
    return %c0_i32, %c0_i32_0 : i32, i32
  }
}

</mosaic_0001>

<llo_original>
// kernel: tpu_custom_call.1
$region0: #{tpu_custom_call.1}
  #allocation0 [shape = 'u32[]', space=smem, size = 0x4, offset = 0x4, fixed_abs, tag = 'smem constant byte address 0x4 - core index']
  #allocation1 [shape = 'u32[144,128]{1,0:T(1,128)}', space=vmem, size = 0x12000, scoped, tag = 'internal scratch']
  #allocation2 [shape = 'f32[1,1]{1,0:T(1,128)}', space=vmem, size = 0x200, scoped, tag = 'scratch operand']
  %s0 = inlined_call_operand.vmem [shape: f32[8,10], index: 0, kind: input, shape index: {}]
  %s1 = inlined_call_operand.vmem [shape: s32[8,1], index: 1, kind: input, shape index: {}]
  %s2 = inlined_call_operand.vmem [shape: f32[4,256], index: 2, kind: input, shape index: {}]
  %s3 = inlined_call_operand.vmem [shape: f32[4,2], index: 3, kind: input, shape index: {}]
  %s4 = inlined_call_operand.vmem [shape: f32[128,16], index: 4, kind: input, shape index: {}]
  %s5 = inlined_call_operand.vmem [shape: f32[32,128], index: 5, kind: input, shape index: {}]
  %s6 = inlined_call_operand.hbm [shape: f32[1,1], index: 6, kind: output, shape index: {}]
  %s7 = sld [smem:[#allocation0]]
  $region42: #{tpu_custom_call.1} parent=0
    _
  %s9 = ssub.s32 1, %s7
  %s10 = scalar_select 0, %s9, %s7
  $region1: #{tpu_custom_call.1} parent=0
    #allocation3 [shape = 'u8[512]{0}', space=smem, size = 0x200, scoped, tag = 'output window, operand 0, single buffered']
    #allocation4 [shape = 's32[1]{0}', space=sflag, size = 0x4, scoped, tag = 'scoped memory for tpu_custom_call.1']
    %11 = vsyncpa [#allocation4], 0
    // Predicated region
    $region2: #{tpu_custom_call.1} parent=1 // pred_check
      _
    $region3: #{tpu_custom_call.1} parent=1 // pred_check_branch
      %13 = sbr.rel (0) target = $region5
    $region4: #{tpu_custom_call.1} parent=1 // pred_region
      _
    $region5: #{tpu_custom_call.1} parent=1 // pred_fallthru
      _
    // Predicated region
    $region6: #{tpu_custom_call.1} parent=1 // pred_check
      _
    $region7: #{tpu_custom_call.1} parent=1 // pred_check_branch
      %15 = sbr.rel (0) target = $region9
    $region8: #{tpu_custom_call.1} parent=1 // pred_region
      _
    $region9: #{tpu_custom_call.1} parent=1 // pred_fallthru
      _
    // Predicated region
    $region10: #{tpu_custom_call.1} parent=1 // pred_check
      _
    $region11: #{tpu_custom_call.1} parent=1 // pred_check_branch
      %17 = sbr.rel (0) target = $region13
    $region12: #{tpu_custom_call.1} parent=1 // pred_region
      _
    $region13: #{tpu_custom_call.1} parent=1 // pred_fallthru
      _
    // Predicated region
    $region14: #{tpu_custom_call.1} parent=1 // pred_check
      _
    $region15: #{tpu_custom_call.1} parent=1 // pred_check_branch
      %19 = sbr.rel (0) target = $region17
    $region16: #{tpu_custom_call.1} parent=1 // pred_region
      _
    $region17: #{tpu_custom_call.1} parent=1 // pred_fallthru
      _
    // Predicated region
    $region18: #{tpu_custom_call.1} parent=1 // pred_check
      _
    $region19: #{tpu_custom_call.1} parent=1 // pred_check_branch
      %21 = sbr.rel (0) target = $region21
    $region20: #{tpu_custom_call.1} parent=1 // pred_region
      _
    $region21: #{tpu_custom_call.1} parent=1 // pred_fallthru
      _
    // Predicated region
    $region22: #{tpu_custom_call.1} parent=1 // pred_check
      _
    $region23: #{tpu_custom_call.1} parent=1 // pred_check_branch
      %23 = sbr.rel (0) target = $region25
    $region24: #{tpu_custom_call.1} parent=1 // pred_region
      _
    $region25: #{tpu_custom_call.1} parent=1 // pred_fallthru
      _
    %p24 = scmp.eq.s32.totalorder 0, 0
    // Predicated region
    $region26: #{tpu_custom_call.1} parent=1 // pred_check
      %p25 = pneg %p24
    $region27: #{tpu_custom_call.1} parent=1 // pred_check_branch
      %27 = sbr.rel (%p25) target = $region29
    $region28: #{tpu_custom_call.1} parent=1 // pred_region
      %vm28 = vcmask 0
      %29 = vst.msk [vmem:[#allocation2] sm:$0x1] %vm28, 0.0
    $region29: #{tpu_custom_call.1} parent=1 // pred_fallthru
      _
    %v30 = vld [vmem:[%s5] sm:$0xff]
    %v31 = vld [vmem:[%s5 + $0x8] sm:$0xff]
    %v32 = vld [vmem:[%s5 + $0x10] sm:$0xff]
    %v33 = vld [vmem:[%s5 + $0x18] sm:$0xff]
    %v34 = vmul.f32 %v30, %v30
    %v35 = vmul.f32 %v31, %v31
    %v36 = vmul.f32 %v32, %v32
    %v37 = vmul.f32 %v33, %v33
    %38 = vmatprep.subr.mxu0 0.0
    %39 = vmatpush1.msra.mxu0 1.0
    %40 = vmatprep.subr.mxu0 0.0
    %41 = vmatpush1.msra.mxu0 1.0
    %42 = vmatprep.subr.mxu0 0.0
    %43 = vmatpush1.msra.mxu0 1.0
    %44 = vmatprep.subr.mxu0 0.0
    %45 = vmatpush1.msra.mxu0 1.0
    %46 = vmatprep.subr.mxu0 0.0
    %47 = vmatpush1.msra.mxu0 1.0
    %48 = vmatprep.subr.mxu0 0.0
    %49 = vmatpush1.msra.mxu0 1.0
    %50 = vmatprep.subr.mxu0 0.0
    %51 = vmatpush1.msra.mxu0 1.0
    %52 = vmatprep.subr.mxu0 0.0
    %53 = vmatpush1.msra.mxu0 1.0
    %54 = vmatprep.subr.mxu0 0.0
    %55 = vmatpush1.msra.mxu0 1.0
    %56 = vmatprep.subr.mxu0 0.0
    %57 = vmatpush1.msra.mxu0 1.0
    %58 = vmatprep.subr.mxu0 0.0
    %59 = vmatpush1.msra.mxu0 1.0
    %60 = vmatprep.subr.mxu0 0.0
    %61 = vmatpush1.msra.mxu0 1.0
    %62 = vmatprep.subr.mxu0 0.0
    %63 = vmatpush1.msra.mxu0 1.0
    %64 = vmatprep.subr.mxu0 0.0
    %65 = vmatpush1.msra.mxu0 1.0
    %66 = vmatprep.subr.mxu0 0.0
    %67 = vmatpush1.msra.mxu0 1.0
    %68 = vmatprep.subr.mxu0 0.0
    %69 = vmatpush1.msra.mxu0 1.0
    %70 = vmatprep.subr.mxu0 0.0
    %71 = vmatpush1.msra.mxu0 0.0
    %72 = vmatprep.subr.mxu0 0.0
    %73 = vmatpush1.msra.mxu0 0.0
    %74 = vmatprep.subr.mxu0 0.0
    %75 = vmatpush1.msra.mxu0 0.0
    %76 = vmatprep.subr.mxu0 0.0
    %77 = vmatpush1.msra.mxu0 0.0
    %78 = vmatprep.subr.mxu0 0.0
    %79 = vmatpush1.msra.mxu0 0.0
    %80 = vmatprep.subr.mxu0 0.0
    %81 = vmatpush1.msra.mxu0 0.0
    %82 = vmatprep.subr.mxu0 0.0
    %83 = vmatpush1.msra.mxu0 0.0
    %84 = vmatprep.subr.mxu0 0.0
    %85 = vmatpush1.msra.mxu0 0.0
    %86 = vmatprep.subr.mxu0 0.0
    %87 = vmatpush1.msra.mxu0 0.0
    %88 = vmatprep.subr.mxu0 0.0
    %89 = vmatpush1.msra.mxu0 0.0
    %90 = vmatprep.subr.mxu0 0.0
    %91 = vmatpush1.msra.mxu0 0.0
    %92 = vmatprep.subr.mxu0 0.0
    %93 = vmatpush1.msra.mxu0 0.0
    %94 = vmatprep.subr.mxu0 0.0
    %95 = vmatpush1.msra.mxu0 0.0
    %96 = vmatprep.subr.mxu0 0.0
    %97 = vmatpush1.msra.mxu0 0.0
    %98 = vmatprep.subr.mxu0 0.0
    %99 = vmatpush1.msra.mxu0 0.0
    %100 = vmatprep.subr.mxu0 0.0
    %101 = vmatpush1.msra.mxu0 0.0
    %102 = vmatprep.mubr.f32.mxu0 0.0
    %103 = vmatmul.mubr.f32.gmra.mrb[0].mxu0 %v34
    %v104 = vpop.f32.mrb[0].mxu0
    %v105 = vadd.f32 0.0, %v104
    %v106 = vpop.f32.mrb[0].mxu0
    %107 = vmatprep.mubr.f32.mxu0 0.0
    %108 = vmatmul.mubr.f32.gmra.mrb[0].mxu0 %v35
    %v109 = vpop.f32.mrb[0].mxu0
    %v110 = vadd.f32 0.0, %v109
    %v111 = vpop.f32.mrb[0].mxu0
    %112 = vmatprep.mubr.f32.mxu0 0.0
    %113 = vmatmul.mubr.f32.gmra.mrb[0].mxu0 %v36
    %v114 = vpop.f32.mrb[0].mxu0
    %v115 = vadd.f32 0.0, %v114
    %v116 = vpop.f32.mrb[0].mxu0
    %117 = vmatprep.mubr.f32.mxu0 0.0
    %118 = vmatmul.mubr.f32.gmra.mrb[0].mxu0 %v37
    %v119 = vpop.f32.mrb[0].mxu0
    %v120 = vadd.f32 0.0, %v119
    %v121 = vpop.f32.mrb[0].mxu0
    %122 = vdwg.mxu0
    %v123 = vld [vmem:[%s4] sm:$0xff]
    %v124 = vld [vmem:[%s4 + $0x8] sm:$0xff]
    %v125 = vld [vmem:[%s4 + $0x10] sm:$0xff]
    %v126 = vld [vmem:[%s4 + $0x18] sm:$0xff]
    %v127 = vld [vmem:[%s4 + $0x20] sm:$0xff]
    %v128 = vld [vmem:[%s4 + $0x28] sm:$0xff]
    %v129 = vld [vmem:[%s4 + $0x30] sm:$0xff]
    %v130 = vld [vmem:[%s4 + $0x38] sm:$0xff]
    %v131 = vld [vmem:[%s4 + $0x40] sm:$0xff]
    %v132 = vld [vmem:[%s4 + $0x48] sm:$0xff]
    %v133 = vld [vmem:[%s4 + $0x50] sm:$0xff]
    %v134 = vld [vmem:[%s4 + $0x58] sm:$0xff]
    %v135 = vld [vmem:[%s4 + $0x60] sm:$0xff]
    %v136 = vld [vmem:[%s4 + $0x68] sm:$0xff]
    %v137 = vld [vmem:[%s4 + $0x70] sm:$0xff]
    %v138 = vld [vmem:[%s4 + $0x78] sm:$0xff]
    %139 = vmatprep.subr.mxu0 0.0
    %140 = vmatpush1.msra.mxu0 %v123
    %141 = vmatprep.subr.mxu0 0.0
    %142 = vmatpush1.msra.mxu0 %v124
    %143 = vmatprep.subr.mxu0 0.0
    %144 = vmatpush1.msra.mxu0 %v125
    %145 = vmatprep.subr.mxu0 0.0
    %146 = vmatpush1.msra.mxu0 %v126
    %147 = vmatprep.subr.mxu0 0.0
    %148 = vmatpush1.msra.mxu0 %v127
    %149 = vmatprep.subr.mxu0 0.0
    %150 = vmatpush1.msra.mxu0 %v128
    %151 = vmatprep.subr.mxu0 0.0
    %152 = vmatpush1.msra.mxu0 %v129
    %153 = vmatprep.subr.mxu0 0.0
    %154 = vmatpush1.msra.mxu0 %v130
    %155 = vmatprep.subr.mxu0 0.0
    %156 = vmatpush1.msra.mxu0 %v131
    %157 = vmatprep.subr.mxu0 0.0
    %158 = vmatpush1.msra.mxu0 %v132
    %159 = vmatprep.subr.mxu0 0.0
    %160 = vmatpush1.msra.mxu0 %v133
    %161 = vmatprep.subr.mxu0 0.0
    %162 = vmatpush1.msra.mxu0 %v134
    %163 = vmatprep.subr.mxu0 0.0
    %164 = vmatpush1.msra.mxu0 %v135
    %165 = vmatprep.subr.mxu0 0.0
    %166 = vmatpush1.msra.mxu0 %v136
    %167 = vmatprep.subr.mxu0 0.0
    %168 = vmatpush1.msra.mxu0 %v137
    %169 = vmatprep.subr.mxu0 0.0
    %170 = vmatpush1.msra.mxu0 %v138
    %171 = vmatprep.subr.mxu0 0.0
    %172 = vmatpush1.msra.mxu0 0.0
    %173 = vmatprep.subr.mxu0 0.0
    %174 = vmatpush1.msra.mxu0 0.0
    %175 = vmatprep.subr.mxu0 0.0
    %176 = vmatpush1.msra.mxu0 0.0
    %177 = vmatprep.subr.mxu0 0.0
    %178 = vmatpush1.msra.mxu0 0.0
    %179 = vmatprep.subr.mxu0 0.0
    %180 = vmatpush1.msra.mxu0 0.0
    %181 = vmatprep.subr.mxu0 0.0
    %182 = vmatpush1.msra.mxu0 0.0
    %183 = vmatprep.subr.mxu0 0.0
    %184 = vmatpush1.msra.mxu0 0.0
    %185 = vmatprep.subr.mxu0 0.0
    %186 = vmatpush1.msra.mxu0 0.0
    %187 = vmatprep.subr.mxu0 0.0
    %188 = vmatpush1.msra.mxu0 0.0
    %189 = vmatprep.subr.mxu0 0.0
    %190 = vmatpush1.msra.mxu0 0.0
    %191 = vmatprep.subr.mxu0 0.0
    %192 = vmatpush1.msra.mxu0 0.0
    %193 = vmatprep.subr.mxu0 0.0
    %194 = vmatpush1.msra.mxu0 0.0
    %195 = vmatprep.subr.mxu0 0.0
    %196 = vmatpush1.msra.mxu0 0.0
    %197 = vmatprep.subr.mxu0 0.0
    %198 = vmatpush1.msra.mxu0 0.0
    %199 = vmatprep.subr.mxu0 0.0
    %200 = vmatpush1.msra.mxu0 0.0
    %201 = vmatprep.subr.mxu0 0.0
    %202 = vmatpush1.msra.mxu0 0.0
    %203 = vmatprep.mubr.f32.mxu0 0.0
    %204 = vmatmul.mubr.f32.gmra.mrb[0].mxu0 %v30
    %v205 = vpop.f32.mrb[0].mxu0
    %v206 = vadd.f32 0.0, %v205
    %v207 = vpop.f32.mrb[0].mxu0
    %208 = vmatprep.mubr.f32.mxu0 0.0
    %209 = vmatmul.mubr.f32.gmra.mrb[0].mxu0 %v31
    %v210 = vpop.f32.mrb[0].mxu0
    %v211 = vadd.f32 0.0, %v210
    %v212 = vpop.f32.mrb[0].mxu0
    %213 = vmatprep.mubr.f32.mxu0 0.0
    %214 = vmatmul.mubr.f32.gmra.mrb[0].mxu0 %v32
    %v215 = vpop.f32.mrb[0].mxu0
    %v216 = vadd.f32 0.0, %v215
    %v217 = vpop.f32.mrb[0].mxu0
    %218 = vmatprep.mubr.f32.mxu0 0.0
    %219 = vmatmul.mubr.f32.gmra.mrb[0].mxu0 %v33
    %v220 = vpop.f32.mrb[0].mxu0
    %v221 = vadd.f32 0.0, %v220
    %v222 = vpop.f32.mrb[0].mxu0
    %223 = vdwg.mxu0
    %vm224 = vcmask 130048
    %v225 = vsel %vm224, %v206, -inf
    %226 = vmax.xlane.f32.xlu0 %v225
    %v227 = vpop.xlane.xlu0 %226
    %v228 = vsel %vm224, %v211, -inf
    %229 = vmax.xlane.f32.xlu0 %v228
    %v230 = vpop.xlane.xlu0 %229
    %v231 = vsel %vm224, %v216, -inf
    %232 = vmax.xlane.f32.xlu0 %v231
    %v233 = vpop.xlane.xlu0 %232
    %v234 = vsel %vm224, %v221, -inf
    %235 = vmax.xlane.f32.xlu0 %v234
    %v236 = vpop.xlane.xlu0 %235
    %v237 = vmax.f32 %v105, 1e-24
    %v238 = vmax.f32 %v110, 1e-24
    %v239 = vmax.f32 %v115, 1e-24
    %v240 = vmax.f32 %v120, 1e-24
    %v241 = vrsqrt.pop %v237
    %v242 = vrsqrt.pop %v238
    %v243 = vrsqrt.pop %v239
    %v244 = vrsqrt.pop %v240
    %v245 = vmul.f32 %v227, %v241
    %v246 = vmul.f32 %v230, %v242
    %v247 = vmul.f32 %v233, %v243
    %v248 = vmul.f32 %v236, %v244
    %v249 = vsub.f32 1.0, %v245
    %v250 = vsub.f32 1.0, %v246
    %v251 = vsub.f32 1.0, %v247
    %v252 = vsub.f32 1.0, %v248
    %v253 = vand.u32 2147483647, %v249
    %v254 = vand.u32 2147483647, %v250
    %v255 = vand.u32 2147483647, %v251
    %v256 = vand.u32 2147483647, %v252
    %v257 = vld [vmem:[#allocation2] sm:$0x1]
    %vm258 = vcmask 7168
    %v259 = vsel %vm258, %v253, 0.0
    %v260 = vsel %vm258, %v254, 0.0
    %v261 = vadd.f32 %v259, %v260
    %v262 = vsel %vm258, %v255, 0.0
    %v263 = vadd.f32 %v261, %v262
    %v264 = vsel %vm258, %v256, 0.0
    %v265 = vadd.f32 %v263, %v264
    %266 = vadd.xlane.f32.xlu0 %v265
    %v267 = vpop.xlane.xlu0 %266
    %v268 = vrot.slane %v267, 4
    %v269 = vadd.f32 %v267, %v268
    %v270 = vrot.slane %v269, 2
    %v271 = vadd.f32 %v269, %v270
    %v272 = vrot.slane %v271, 1
    %v273 = vadd.f32 %v271, %v272
    %s274 = vtos %v273
    %v275 = vstv %s274
    %v276 = vadd.f32 %v257, %v275
    %vm277 = vcmask 0
    %278 = vst.msk [vmem:[#allocation2] sm:$0x1] %vm277, %v276
    // Predicated region
    $region30: #{tpu_custom_call.1} parent=1 // pred_check
      %p279 = pneg %p24
    $region31: #{tpu_custom_call.1} parent=1 // pred_check_branch
      %281 = sbr.rel (%p279) target = $region33
    $region32: #{tpu_custom_call.1} parent=1 // pred_region
      %v282 = vld [vmem:[%s0] sm:$0xff]
      %vm283 = vcmask 80896
      %v284 = vsel %vm283, %v282, -inf
      %285 = vmax.xlane.f32.xlu0 %v284
      %v286 = vpop.xlane.xlu0 %285
      %v287 = vsub.f32 %v282, %v286
      %v288 = vmul.f32 %v287, 1.442695
      %v289 = vpow.pop %v288
      %v290 = vsel %vm283, %v289, 0.0
      %291 = vadd.xlane.f32.xlu0 %v290
      %v292 = vpop.xlane.xlu0 %291
      %v293 = vlog2.pop %v292
      %v294 = vmul.f32 %v293, 0.6931472
      %v295 = vadd.f32 %v286, %v294
      %v296 = vlaneseq
      %v297 = vand.u32 %v296, 127
      %v298 = vld [vmem:[%s1] sm:$0xff]
      %299 = vset.pattern.permute.xlu0 0
      %300 = vperm.xlu0 %299, %v298
      %v301 = vpop.permute.xlu0 %300
      %vm302 = vcmp.eq.s32.totalorder %v297, %v301
      %v303 = vsel %vm302, %v282, 0.0
      %v304 = vsel %vm283, %v303, 0.0
      %305 = vadd.xlane.f32.xlu0 %v304
      %v306 = vpop.xlane.xlu0 %305
      %v307 = vsub.f32 %v295, %v306
      %v308 = vsel %vm258, %v307, 0.0
      %309 = vadd.xlane.f32.xlu0 %v308
      %v310 = vpop.xlane.xlu0 %309
      %v311 = vrot.slane %v310, 4
      %v312 = vadd.f32 %v310, %v311
      %v313 = vrot.slane %v312, 2
      %v314 = vadd.f32 %v312, %v313
      %v315 = vrot.slane %v314, 1
      %v316 = vadd.f32 %v314, %v315
      %s317 = vtos %v316
      %v318 = vrcp.pop 8.0
      %s319 = vtos %v318
      %s320 = smul.f32 %s317, %s319
      %v321 = vld [vmem:[%s2] sm:$0xff]
      %v323 = vcombine.high %v321, %v321
      %vm325 = vcmask 1043456
      %v326 = vsel %vm325, %v321, -inf
      %v327 = vsel %vm325, %v323, -inf
      %v328 = vmax.f32 %v326, %v327
      %329 = vmax.xlane.f32.xlu0 %v328
      %v330 = vpop.xlane.xlu0 %329
      %v331 = vsel %vm325, %v321, inf
      %v332 = vsel %vm325, %v323, inf
      %v333 = vmin.f32 %v331, %v332
      %334 = vmin.xlane.f32.xlu0 %v333
      %v335 = vpop.xlane.xlu0 %334
      %v336 = vld [vmem:[%s3] sm:$0xf]
      %v337 = vsub.f32 %v330, %v336
      %v338 = vmul.f32 %v337, %v337
      %vm339 = vcmask 3072
      %v340 = vsel %vm339, %v338, 0.0
      %341 = vadd.xlane.f32.xlu0 %v340
      %v342 = vpop.xlane.xlu0 %341
      %v343 = vrot.slane %v342, 4
      %v344 = vadd.f32 %v342, %v343
      %v345 = vrot.slane %v344, 2
      %v346 = vadd.f32 %v344, %v345
      %v347 = vrot.slane %v346, 1
      %v348 = vadd.f32 %v346, %v347
      %s349 = vtos %v348
      %v350 = vrcp.pop 4.0
      %s351 = vtos %v350
      %s352 = smul.f32 %s349, %s351
      %v353 = vsub.f32 %v335, %v336
      %v354 = vmul.f32 %v353, %v353
      %356 = vrot.lane.b32.xlu0 %v354, 127
      %v357 = vpop.permute.xlu0 %356
      %v359 = vsel %vm339, %v357, 0.0
      %360 = vadd.xlane.f32.xlu0 %v359
      %v361 = vpop.xlane.xlu0 %360
      %v362 = vrot.slane %v361, 4
      %v363 = vadd.f32 %v361, %v362
      %v364 = vrot.slane %v363, 2
      %v365 = vadd.f32 %v363, %v364
      %v366 = vrot.slane %v365, 1
      %v367 = vadd.f32 %v365, %v366
      %s368 = vtos %v367
      %v369 = vrcp.pop 4.0
      %s370 = vtos %v369
      %s371 = smul.f32 %s368, %s370
      %s372 = sadd.f32 %s352, %s371
      %v373 = vld [vmem:[#allocation2] sm:$0x1]
      %s374 = vtos %v373
      %s375 = smul.f32 %s374, 0.03125
      %s376 = sadd.f32 %s320, %s375
      %s377 = sadd.f32 %s376, %s372
      %s378 = scalar_lea.smem [#allocation3], 0
      %379 = sst [smem:[%s378]] %s377
    $region33: #{tpu_custom_call.1} parent=1 // pred_fallthru
      _
    // Predicated region
    $region34: #{tpu_custom_call.1} parent=1 // pred_check
      _
    $region35: #{tpu_custom_call.1} parent=1 // pred_check_branch
      %381 = sbr.rel (0) target = $region37
    $region36: #{tpu_custom_call.1} parent=1 // pred_region
      %s383 = ssub.s32 16, 16
      %384 = vsyncadd [#allocation4], %s383
      %387 = dma.smem_to_hbm [#allocation3], 16, %s6, [#allocation4]
    $region37: #{tpu_custom_call.1} parent=1 // pred_fallthru
      _
    // Predicated region
    $region38: #{tpu_custom_call.1} parent=1 // pred_check
      _
    $region39: #{tpu_custom_call.1} parent=1 // pred_check_branch
      %389 = sbr.rel (0) target = $region41
    $region40: #{tpu_custom_call.1} parent=1 // pred_region
      %390 = dma.done [#allocation4], 16
    $region41: #{tpu_custom_call.1} parent=1 // pred_fallthru
      _
    %391 = sfence
    %392 = vsyncpa [#allocation4], 1

</llo_original>
